<compile_context>
chip_gen: v6e
topology: v6e:2x2x1
jax: 0.10.0
libtpu: 0.0.40
codegen_flags: <defaults>
</compile_context>

<pallas_src>
import functools

import jax
import jax.numpy as jnp
from jax.experimental import pallas as pl
from jax.experimental.pallas import tpu as pltpu


def channel_attention_kernel(x_ref, w1t_ref, w2t_ref, o_ref, sum_acc, max_acc,
                             *, inv_hw, true_hw, needs_mask):
    # x_ref  : (bn, C, hw_tile)  one batch-tile x full channels x spatial chunk
    # w1t_ref: (C, HID)          conv1 weight, pre-transposed in the wrapper
    # w2t_ref: (HID, C)          conv2 weight, pre-transposed in the wrapper
    # o_ref  : (bn, C) or (bn, 1, C)  sigmoid(mlp(avg) + mlp(max)) per channel
    # sum_acc, max_acc: (bn, C) f32 scratch accumulators (persist over k)
    k = pl.program_id(1)

    @pl.when(k == 0)
    def _init():
        sum_acc[...] = jnp.zeros_like(sum_acc)
        max_acc[...] = jnp.full_like(max_acc, -jnp.inf)

    x = x_ref[...]                                   # native dtype tile
    hw_tile = x.shape[-1]

    # Mean accumulation: explicit f32 upcast so bf16 inputs never reduce in
    # bf16.  Padded lanes (wrapper jnp.pad) are zeros -> neutral for the sum.
    sum_acc[...] += jnp.sum(x.astype(jnp.float32), axis=-1)        # (bn, C)

    # Max accumulation: mask pad lanes to -inf (only needed when HW was padded
    # up to a 128 multiple).  The extra cmp+select is free: kernel is HBM-bound
    # and VALU has slack.
    if needs_mask:
        lane = jax.lax.broadcasted_iota(jnp.int32, x.shape, dimension=2)
        valid = (k * hw_tile + lane) < true_hw
        x_for_max = jnp.where(valid, x.astype(jnp.float32), -jnp.inf)
    else:
        x_for_max = x.astype(jnp.float32)
    max_acc[...] = jnp.maximum(max_acc[...], jnp.max(x_for_max, axis=-1))

    @pl.when(k == pl.num_programs(1) - 1)
    def _finalize():
        bn = sum_acc.shape[0]
        avg = sum_acc[...] * inv_hw                  # (bn, C) mean over true HW
        mx = max_acc[...]                            # (bn, C)

        # Fused shared MLP: run avg and max through one stacked matmul pair.
        # With bn up to 8 this is a (16, C) x (C, HID) GEMM, amortizing MXU
        # pipeline latency over the whole batch tile.
        pooled = jnp.concatenate([avg, mx], axis=0)                 # (2*bn, C)
        w1t = w1t_ref[...].astype(jnp.float32)                      # (C, HID)
        w2t = w2t_ref[...].astype(jnp.float32)                      # (HID, C)
        h = jnp.maximum(
            jnp.dot(pooled, w1t, preferred_element_type=jnp.float32), 0.0)
        y = jnp.dot(h, w2t, preferred_element_type=jnp.float32)     # (2*bn, C)

        out = jax.nn.sigmoid(y[:bn] + y[bn:])                       # (bn, C)
        o_ref[...] = out.reshape(o_ref.shape).astype(o_ref.dtype)


def _tpu_budgets():
    """(target_block_bytes, vmem_limit_cap) chosen per TPU generation."""
    vmem_cap = 64 * 2**20
    try:
        info = pltpu.get_tpu_info()
        vmem_cap = int(getattr(info, "vmem_capacity_bytes", vmem_cap))
    except Exception:
        pass
    if vmem_cap > 64 * 2**20:
        # v5e / v6e: 128 MiB physical VMEM -> bigger blocks, generous cap.
        return 8 * 2**20, 96 * 2**20
    # v7x: 64 MiB physical VMEM -> keep compile headroom.
    return 4 * 2**20, 48 * 2**20


def _pick_bn(N):
    """Largest divisor of N up to 8, preferring >= 2 grid steps on the
    parallel (batch) axis so v7x's two TensorCores both get work."""
    candidates = [d for d in range(1, min(N, 8) + 1) if N % d == 0]
    multi_step = [d for d in candidates if N // d >= 2]
    return max(multi_step) if multi_step else max(candidates)


def _pick_hw_tile(HW_pad, C, bn, itemsize, target_block_bytes):
    """Lane-dense multiple of 128 dividing HW_pad, sized toward the per-block
    byte budget (>= 512 lanes whenever the budget allows)."""
    lanes_budget = max(128, target_block_bytes // max(1, bn * C * itemsize))
    tile = min(HW_pad, (lanes_budget // 128) * 128)
    tile = max(tile, 128)
    while HW_pad % tile != 0:
        tile -= 128
    return tile


def channel_attention(x, w1, w2, *, hw_tile=None):
    """x: (N, C, H, W); w1: (C//ratio, C); w2: (C, C//ratio). Returns (N, C, 1, 1)."""
    N, C, H, W = x.shape
    HW = H * W
    # Pad the flattened spatial axis up to a 128 multiple so blocks stay
    # lane-dense even for 7x7 / 14x14 / 28x28 feature maps.
    HW_pad = ((HW + 127) // 128) * 128
    needs_mask = HW_pad != HW
    x_flat = x.reshape(N, C, HW)
    if needs_mask:
        x_flat = jnp.pad(x_flat, ((0, 0), (0, 0), (0, HW_pad - HW)))

    # Pre-transpose weights once on the host/XLA side (grid-resident in VMEM).
    w1t = jnp.transpose(w1)   # (C, HID)
    w2t = jnp.transpose(w2)   # (HID, C)
    HID = w1t.shape[1]

    bn = _pick_bn(N)
    assert N % bn == 0, "bn must divide N"

    target_block_bytes, vmem_cap_limit = _tpu_budgets()
    if hw_tile is None:
        hw_tile = _pick_hw_tile(HW_pad, C, bn, x.dtype.itemsize,
                                target_block_bytes)
    assert HW_pad % hw_tile == 0, "hw_tile must divide padded H*W"
    assert hw_tile % 128 == 0 or hw_tile == HW_pad, "hw_tile must be lane-dense"

    grid = (N // bn, HW_pad // hw_tile)

    # Sublane-dense 2-D output block when tile-legal; otherwise a (bn, 1, C)
    # block (1 == full middle dim) which is always legal.
    if bn % 8 == 0 or bn == N:
        out_shape = jax.ShapeDtypeStruct((N, C), jnp.float32)
        out_spec = pl.BlockSpec((bn, C), lambda i, k: (i, 0))
    else:
        out_shape = jax.ShapeDtypeStruct((N, 1, C), jnp.float32)
        out_spec = pl.BlockSpec((bn, 1, C), lambda i, k: (i, 0, 0))

    # VMEM budget: double-buffered x block + weights + scratch, with headroom.
    block_bytes = bn * C * hw_tile * x.dtype.itemsize
    vmem_limit = int(min(vmem_cap_limit, max(16 * 2**20, 6 * block_bytes)))

    out = pl.pallas_call(
        functools.partial(channel_attention_kernel,
                          inv_hw=1.0 / HW, true_hw=HW, needs_mask=needs_mask),
        out_shape=out_shape,
        grid_spec=pltpu.PrefetchScalarGridSpec(
            num_scalar_prefetch=0,
            grid=grid,
            in_specs=[
                pl.BlockSpec((bn, C, hw_tile), lambda i, k: (i, 0, k)),
                pl.BlockSpec((C, HID), lambda i, k: (0, 0)),
                pl.BlockSpec((HID, C), lambda i, k: (0, 0)),
            ],
            out_specs=out_spec,
            scratch_shapes=[
                pltpu.VMEM((bn, C), jnp.float32),   # running sum
                pltpu.VMEM((bn, C), jnp.float32),   # running max
            ],
        ),
        compiler_params=pltpu.CompilerParams(
            dimension_semantics=("parallel", "arbitrary"),
            vmem_limit_bytes=vmem_limit,
        ),
    )(x_flat, w1t, w2t)

    return out.reshape(N, C, 1, 1)


def channel_attention_ref(x, w1, w2):
    # Pure-JAX reference (matches PyTorch forward semantics).
    avg = jnp.mean(x.astype(jnp.float32), axis=(2, 3))  # (N, C)
    mx = jnp.max(x.astype(jnp.float32), axis=(2, 3))    # (N, C)

    def mlp(p):
        h = jnp.maximum(p @ w1.astype(jnp.float32).T, 0.0)
        return h @ w2.astype(jnp.float32).T

    return jax.nn.sigmoid(mlp(avg) + mlp(mx)).reshape(*x.shape[:2], 1, 1)


if __name__ == "__main__":
    key = jax.random.PRNGKey(0)
    k_x, k_w1, k_w2 = jax.random.split(key, 3)

    # 14x14 = 196 spatial positions: exercises the ragged-HW pad (-> 256) and
    # the -inf masking path for the running max.  N=16 -> bn=8 (sublane-dense
    # accumulators/output) with 2 parallel batch steps for the megacore.
    N, C, H, W = 16, 32, 14, 14   # in_planes=32
    ratio = 16                    # default rotio=16 -> hidden = 2
    hidden = C // ratio

    x = jax.random.normal(k_x, (N, C, H, W), dtype=jnp.float32)
    # Conv2d(C, C//ratio, 1, bias=False) weight -> (hidden, C, 1, 1); squeeze spatial.
    w1 = jax.random.normal(k_w1, (hidden, C), dtype=jnp.float32) * 0.1
    # Conv2d(C//ratio, C, 1, bias=False) weight -> (C, hidden, 1, 1); squeeze spatial.
    w2 = jax.random.normal(k_w2, (C, hidden), dtype=jnp.float32) * 0.1

    # hw_tile=128 -> grid (2, 2): exercises both the parallel batch axis and
    # the multi-step spatial reduction with scratch accumulators + masking.
    out = channel_attention(x, w1, w2, hw_tile=128)
    out = jax.block_until_ready(out)

    ref = channel_attention_ref(x, w1, w2)
    assert out.shape == (N, C, 1, 1)
    assert jnp.allclose(out, ref, atol=1e-5, rtol=1e-5), "mismatch vs reference"

    print("KERNEL_OK")
</pallas_src>

<mosaic_0001>
module attributes {stable_mosaic.version = 11 : i64} {
  func.func @channel_attention_kernel(%arg0: i32, %arg1: i32, %arg2: memref<8x32x128xf32, #tpu.memory_space<vmem>>, %arg3: memref<32x2xf32, #tpu.memory_space<vmem>>, %arg4: memref<2x32xf32, #tpu.memory_space<vmem>>, %arg5: memref<8x32xf32, #tpu.memory_space<vmem>>, %arg6: memref<8x32xf32, #tpu.memory_space<vmem>>, %arg7: memref<8x32xf32, #tpu.memory_space<vmem>>) attributes {dimension_semantics = [#tpu.dimension_semantics<parallel>, #tpu.dimension_semantics<arbitrary>], iteration_bounds = array<i64: 2, 2>, scalar_prefetch = 0 : i64, scratch_operands = 2 : i64, tpu.core_type = #tpu.core_type<tc>, window_params = [{transform_indices = @transform_0, window_bounds = array<i64: 8, 32, 128>}, {pipeline_mode = #tpu.pipeline_mode<synchronous>, transform_indices = @transform_1, window_bounds = array<i64: 32, 2>}, {pipeline_mode = #tpu.pipeline_mode<synchronous>, transform_indices = @transform_2, window_bounds = array<i64: 2, 32>}, {transform_indices = @transform_3, window_bounds = array<i64: 8, 32>}]} {
    %c0_i32 = arith.constant 0 : i32
    %0 = arith.cmpi eq, %arg1, %c0_i32 : i32
    %1 = arith.extui %0 : i1 to i32
    %c0_i32_0 = arith.constant 0 : i32
    %2 = arith.cmpi ne, %1, %c0_i32_0 : i32
    scf.if %2 {
      %cst_14 = arith.constant 0.000000e+00 : f32
      %23 = vector.broadcast %cst_14 : f32 to vector<8x32xf32>
      %c0_15 = arith.constant 0 : index
      %c0_16 = arith.constant 0 : index
      %24 = vector.load %arg6[%c0_15, %c0_16] : memref<8x32xf32, #tpu.memory_space<vmem>>, vector<8x32xf32>
      tpu.vector_store %arg6[%c0_15, %c0_16], %23 {strides = array<i32>} : memref<8x32xf32, #tpu.memory_space<vmem>>, vector<8x32xf32>,
      %cst_17 = arith.constant 0xFF800000 : f32
      %25 = vector.broadcast %cst_17 : f32 to vector<8x32xf32>
      %c0_18 = arith.constant 0 : index
      %c0_19 = arith.constant 0 : index
      %26 = vector.load %arg7[%c0_18, %c0_19] : memref<8x32xf32, #tpu.memory_space<vmem>>, vector<8x32xf32>
      tpu.vector_store %arg7[%c0_18, %c0_19], %25 {strides = array<i32>} : memref<8x32xf32, #tpu.memory_space<vmem>>, vector<8x32xf32>,
    } else {
    }
    %c0 = arith.constant 0 : index
    %c0_1 = arith.constant 0 : index
    %c0_2 = arith.constant 0 : index
    %3 = vector.load %arg2[%c0, %c0_1, %c0_2] : memref<8x32x128xf32, #tpu.memory_space<vmem>>, vector<8x32x128xf32>
    %c0_3 = arith.constant 0 : index
    %c0_4 = arith.constant 0 : index
    %4 = vector.load %arg6[%c0_3, %c0_4] : memref<8x32xf32, #tpu.memory_space<vmem>>, vector<8x32xf32>
    %cst = arith.constant dense<0.000000e+00> : vector<8x32xf32>
    %5 = vector.multi_reduction <add>, %3, %cst [2] : vector<8x32x128xf32> to vector<8x32xf32>
    %6 = arith.addf %4, %5 : vector<8x32xf32>
    %c0_5 = arith.constant 0 : index
    %c0_6 = arith.constant 0 : index
    %7 = vector.load %arg6[%c0_5, %c0_6] : memref<8x32xf32, #tpu.memory_space<vmem>>, vector<8x32xf32>
    tpu.vector_store %arg6[%c0_5, %c0_6], %6 {strides = array<i32>} : memref<8x32xf32, #tpu.memory_space<vmem>>, vector<8x32xf32>,
    %8 = tpu.iota {dimensions = array<i32: 2>} : vector<8x32x128xi32>
    %c128_i32 = arith.constant 128 : i32
    %9 = arith.muli %arg1, %c128_i32 : i32
    %10 = vector.broadcast %9 : i32 to vector<8x32x128xi32>
    %11 = arith.addi %10, %8 : vector<8x32x128xi32>
    %c196_i32 = arith.constant 196 : i32
    %12 = vector.broadcast %c196_i32 : i32 to vector<8x32x128xi32>
    %13 = arith.cmpi slt, %11, %12 : vector<8x32x128xi32>
    %cst_7 = arith.constant 0xFF800000 : f32
    %14 = vector.broadcast %cst_7 : f32 to vector<8x32x128xf32>
    %15 = arith.select %13, %3, %14 : vector<8x32x128xi1>, vector<8x32x128xf32>
    %c0_8 = arith.constant 0 : index
    %c0_9 = arith.constant 0 : index
    %16 = vector.load %arg7[%c0_8, %c0_9] : memref<8x32xf32, #tpu.memory_space<vmem>>, vector<8x32xf32>
    %cst_10 = arith.constant dense<0xFF800000> : vector<8x32xf32>
    %17 = vector.multi_reduction <maximumf>, %15, %cst_10 [2] : vector<8x32x128xf32> to vector<8x32xf32>
    %18 = arith.maximumf %16, %17 : vector<8x32xf32>
    %c0_11 = arith.constant 0 : index
    %c0_12 = arith.constant 0 : index
    %19 = vector.load %arg7[%c0_11, %c0_12] : memref<8x32xf32, #tpu.memory_space<vmem>>, vector<8x32xf32>
    tpu.vector_store %arg7[%c0_11, %c0_12], %18 {strides = array<i32>} : memref<8x32xf32, #tpu.memory_space<vmem>>, vector<8x32xf32>,
    %c1_i32 = arith.constant 1 : i32
    %20 = arith.cmpi eq, %arg1, %c1_i32 : i32
    %21 = arith.extui %20 : i1 to i32
    %c0_i32_13 = arith.constant 0 : i32
    %22 = arith.cmpi ne, %21, %c0_i32_13 : i32
    scf.if %22 {
      %c0_14 = arith.constant 0 : index
      %c0_15 = arith.constant 0 : index
      %23 = vector.load %arg6[%c0_14, %c0_15] : memref<8x32xf32, #tpu.memory_space<vmem>>, vector<8x32xf32>
      %cst_16 = arith.constant 0.00510204071 : f32
      %24 = vector.broadcast %cst_16 : f32 to vector<8x32xf32>
      %25 = arith.mulf %23, %24 : vector<8x32xf32>
      %c0_17 = arith.constant 0 : index
      %c0_18 = arith.constant 0 : index
      %26 = vector.load %arg7[%c0_17, %c0_18] : memref<8x32xf32, #tpu.memory_space<vmem>>, vector<8x32xf32>
      %27 = tpu.concatenate %25, %26 in 0 : vector<8x32xf32>, vector<8x32xf32> -> vector<16x32xf32>
      %c0_19 = arith.constant 0 : index
      %c0_20 = arith.constant 0 : index
      %28 = vector.load %arg3[%c0_19, %c0_20] : memref<32x2xf32, #tpu.memory_space<vmem>>, vector<32x2xf32>
      %c0_21 = arith.constant 0 : index
      %c0_22 = arith.constant 0 : index
      %29 = vector.load %arg4[%c0_21, %c0_22] : memref<2x32xf32, #tpu.memory_space<vmem>>, vector<2x32xf32>
      %cst_23 = arith.constant dense<0.000000e+00> : vector<16x2xf32>
      %30 = tpu.matmul %27, %28, %cst_23 {dimension_numbers = #tpu.dot_dimension_numbers<[1], [0], [0], [1], [0, 0, 1, 1], [], []>} : vector<16x32xf32>, vector<32x2xf32>, vector<16x2xf32> -> vector<16x2xf32>
      %cst_24 = arith.constant 0.000000e+00 : f32
      %31 = vector.broadcast %cst_24 : f32 to vector<16x2xf32>
      %32 = arith.maximumf %30, %31 : vector<16x2xf32>
      %cst_25 = arith.constant dense<0.000000e+00> : vector<16x32xf32>
      %33 = tpu.matmul %32, %29, %cst_25 {dimension_numbers = #tpu.dot_dimension_numbers<[1], [0], [0], [1], [0, 0, 1, 1], [], []>} : vector<16x2xf32>, vector<2x32xf32>, vector<16x32xf32> -> vector<16x32xf32>
      %34 = vector.extract_strided_slice %33 {offsets = [0, 0], sizes = [8, 32], strides = [1, 1]} : vector<16x32xf32> to vector<8x32xf32>
      %35 = vector.extract_strided_slice %33 {offsets = [8, 0], sizes = [8, 32], strides = [1, 1]} : vector<16x32xf32> to vector<8x32xf32>
      %36 = arith.addf %34, %35 : vector<8x32xf32>
      %37 = arith.negf %36 : vector<8x32xf32>
      %38 = math.exp %37 : vector<8x32xf32>
      %cst_26 = arith.constant 1.000000e+00 : f32
      %39 = vector.broadcast %cst_26 : f32 to vector<8x32xf32>
      %40 = arith.addf %39, %38 : vector<8x32xf32>
      %41 = arith.divf %39, %40 : vector<8x32xf32>
      %c0_27 = arith.constant 0 : index
      %c0_28 = arith.constant 0 : index
      %42 = vector.load %arg5[%c0_27, %c0_28] : memref<8x32xf32, #tpu.memory_space<vmem>>, vector<8x32xf32>
      tpu.vector_store %arg5[%c0_27, %c0_28], %41 {strides = array<i32>} : memref<8x32xf32, #tpu.memory_space<vmem>>, vector<8x32xf32>,
    } else {
    }
    return
  }
  func.func @transform_0(%arg0: i32, %arg1: i32) -> (i32, i32, i32) {
    %c0_i32 = arith.constant 0 : i32
    %c0_i32_0 = arith.constant 0 : i32
    return %arg0, %c0_i32, %arg1 : i32, i32, i32
  }
  func.func @transform_1(%arg0: i32, %arg1: i32) -> (i32, i32) {
    %c0_i32 = arith.constant 0 : i32
    %c0_i32_0 = arith.constant 0 : i32
    %c0_i32_1 = arith.constant 0 : i32
    return %c0_i32, %c0_i32_0 : i32, i32
  }
  func.func @transform_2(%arg0: i32, %arg1: i32) -> (i32, i32) {
    %c0_i32 = arith.constant 0 : i32
    %c0_i32_0 = arith.constant 0 : i32
    %c0_i32_1 = arith.constant 0 : i32
    return %c0_i32, %c0_i32_0 : i32, i32
  }
  func.func @transform_3(%arg0: i32, %arg1: i32) -> (i32, i32) {
    %c0_i32 = arith.constant 0 : i32
    %c0_i32_0 = arith.constant 0 : i32
    return %arg0, %c0_i32 : i32, i32
  }
}

</mosaic_0001>

<llo_original>
// kernel: tpu_custom_call.1
$region0: #{tpu_custom_call.1}
  #allocation0 [shape = 'u32[]', space=smem, size = 0x4, offset = 0x4, fixed_abs, tag = 'smem constant byte address 0x4 - core index']
  #allocation1 [shape = 'u32[144,128]{1,0:T(1,128)}', space=vmem, size = 0x12000, scoped, tag = 'internal scratch']
  #allocation2 [shape = 'f32[8,32]{1,0:T(8,128)}', space=vmem, size = 0x1000, scoped, tag = 'scratch operand']
  #allocation3 [shape = 'f32[8,32]{1,0:T(8,128)}', space=vmem, size = 0x1000, scoped, tag = 'scratch operand']
  %s0 = inlined_call_operand.hbm [shape: f32[16,32,256], index: 0, kind: input, shape index: {}]
  %s1 = inlined_call_operand.vmem [shape: f32[32,2], index: 1, kind: input, shape index: {}]
  %s2 = inlined_call_operand.vmem [shape: f32[2,32], index: 2, kind: input, shape index: {}]
  %s3 = inlined_call_operand.hbm [shape: f32[16,32], index: 3, kind: output, shape index: {}]
  %s4 = sld [smem:[#allocation0]]
  $region57: #{tpu_custom_call.1} parent=0
    _
  %s6 = ssub.s32 1, %s4
  %s7 = scalar_select 0, %s6, %s4
  $region1: #{tpu_custom_call.1} parent=0
    #allocation4 [shape = 'u8[262144]{0}', space=vmem, size = 0x40000, scoped, tag = 'input window, operand 0']
    #allocation5 [shape = 's32[2]{0}', space=sflag, size = 0x8, scoped, tag = 'scoped memory for tpu_custom_call.1']
    #allocation6 [shape = 's32[2]{0}', space=sflag, size = 0x8, scoped, tag = 'scoped memory for tpu_custom_call.1']
    #allocation7 [shape = 'u8[8192]{0}', space=vmem, size = 0x2000, scoped, tag = 'output window, operand 0']
    %8 = vsyncpa [#allocation5], 0
    %s9 = scalar_lea.sflag [#allocation5], 1
    %10 = vsyncpa %s9, 0
    %11 = vsyncpa [#allocation6], 0
    %s12 = scalar_lea.sflag [#allocation6], 1
    %13 = vsyncpa %s12, 0
    loop: start=0, step=1, limit=6
    $region2: #{tpu_custom_call.1} parent=1 // loop_pre_header
      _
    $region3: #{tpu_custom_call.1} parent=1 // loop_header
      %s15 = sphi 0, %s19
      %p16 = scmp.ge.s32.totalorder %s15, 6
      %s22 = sphi 0, %s34
      %s23 = sphi 0, %s30
      %s24 = sphi 0, %s22
      %s25 = sphi 0, %s23
      %s26 = sphi 0, %s24
      %s27 = sphi 0, %s25
      %s39 = sphi 0, %s41
      %s42 = sphi 0, %s39
      %s43 = sphi 0, %s42
      %s59 = sphi 0, %s43
      %s63 = sphi 0, %s63
      %s65 = sphi 0, %s63
      %s66 = sphi 0, %s65
      %s80 = sphi 0, %s66
      %s84 = sphi 0, %s84
      %s86 = sphi 0, %s84
      %s87 = sphi 0, %s86
      %s101 = sphi 0, %s87
      %s107 = sphi 0, %s109
      %s110 = sphi 0, %s107
      %s111 = sphi 0, %s110
      %s127 = sphi 0, %s111
    $region4: #{tpu_custom_call.1} parent=1 // loop_header_branch
      %18 = sbr.rel (%p16) target = $region8
    $region5: #{tpu_custom_call.1} parent=1 // loop_body
      %s20 = ssub.s32 %s15, 1
      %s21 = ssub.s32 %s15, 2
      %s28 = sadd.s32 1, %s23
      %p29 = scmp.ge.s32.totalorder %s28, 2
      %s30 = scalar_select %p29, 0, %s28
      %s31 = sadd.s32 1, %s22
      %s32 = scalar_select %p29, %s31, %s22
      %p33 = scmp.ge.s32.totalorder %s32, 2
      %s34 = scalar_select %p33, 0, %s32
      %s35 = ssub.s32 %s22, %s34
      %s36 = ssub.s32 %s23, %s30
      %s37 = sor.u32 %s35, %s36
      %p38 = scmp.eq.s32.totalorder %s37, 0
      %s40 = sadd.s32 %s39, 1
      %s41 = scalar_select %p38, %s39, %s40
      %p44 = pneg %p38
      %p45 = scmp.eq.s32.totalorder %s15, 3
      %p46 = por %p44, %p45
      %p47 = scmp.ne.s32.totalorder %s39, %s42
      %p48 = scmp.eq.s32.totalorder %s15, 0
      %p49 = por %p47, %p48
      %p50 = scmp.ne.s32.totalorder %s39, %s42
      %p51 = scmp.eq.s32.totalorder %s20, 3
      %p52 = por %p50, %p51
      %p53 = scmp.ne.s32.totalorder %s42, %s43
      %p54 = scmp.eq.s32.totalorder %s20, 0
      %p55 = por %p53, %p54
      %p56 = scmp.ne.s32.totalorder %s42, %s43
      %p57 = scmp.eq.s32.totalorder %s21, 3
      %p58 = por %p56, %p57
      %p60 = scmp.ne.s32.totalorder %s43, %s59
      %p61 = scmp.eq.s32.totalorder %s21, 0
      %p62 = por %p60, %p61
      %s64 = sadd.s32 %s63, 1
      %p67 = scmp.eq.s32.totalorder %s15, 3
      %p68 = scmp.ne.s32.totalorder %s63, %s65
      %p69 = scmp.eq.s32.totalorder %s15, 0
      %p70 = por %p68, %p69
      %p71 = scmp.ne.s32.totalorder %s63, %s65
      %p72 = scmp.eq.s32.totalorder %s20, 3
      %p73 = por %p71, %p72
      %p74 = scmp.ne.s32.totalorder %s65, %s66
      %p75 = scmp.eq.s32.totalorder %s20, 0
      %p76 = por %p74, %p75
      %p77 = scmp.ne.s32.totalorder %s65, %s66
      %p78 = scmp.eq.s32.totalorder %s21, 3
      %p79 = por %p77, %p78
      %p81 = scmp.ne.s32.totalorder %s66, %s80
      %p82 = scmp.eq.s32.totalorder %s21, 0
      %p83 = por %p81, %p82
      %s85 = sadd.s32 %s84, 1
      %p88 = scmp.eq.s32.totalorder %s15, 3
      %p89 = scmp.ne.s32.totalorder %s84, %s86
      %p90 = scmp.eq.s32.totalorder %s15, 0
      %p91 = por %p89, %p90
      %p92 = scmp.ne.s32.totalorder %s84, %s86
      %p93 = scmp.eq.s32.totalorder %s20, 3
      %p94 = por %p92, %p93
      %p95 = scmp.ne.s32.totalorder %s86, %s87
      %p96 = scmp.eq.s32.totalorder %s20, 0
      %p97 = por %p95, %p96
      %p98 = scmp.ne.s32.totalorder %s86, %s87
      %p99 = scmp.eq.s32.totalorder %s21, 3
      %p100 = por %p98, %p99
      %p102 = scmp.ne.s32.totalorder %s87, %s101
      %p103 = scmp.eq.s32.totalorder %s21, 0
      %p104 = por %p102, %p103
      %s105 = ssub.s32 %s22, %s34
      %p106 = scmp.eq.s32.totalorder %s105, 0
      %s108 = sadd.s32 %s107, 1
      %s109 = scalar_select %p106, %s107, %s108
      %p112 = pneg %p106
      %p113 = scmp.eq.s32.totalorder %s15, 3
      %p114 = por %p112, %p113
      %p115 = scmp.ne.s32.totalorder %s107, %s110
      %p116 = scmp.eq.s32.totalorder %s15, 0
      %p117 = por %p115, %p116
      %p118 = scmp.ne.s32.totalorder %s107, %s110
      %p119 = scmp.eq.s32.totalorder %s20, 3
      %p120 = por %p118, %p119
      %p121 = scmp.ne.s32.totalorder %s110, %s111
      %p122 = scmp.eq.s32.totalorder %s20, 0
      %p123 = por %p121, %p122
      %p124 = scmp.ne.s32.totalorder %s110, %s111
      %p125 = scmp.eq.s32.totalorder %s21, 3
      %p126 = por %p124, %p125
      %p128 = scmp.ne.s32.totalorder %s111, %s127
      %p129 = scmp.eq.s32.totalorder %s21, 0
      %p130 = por %p128, %p129
      %p131 = scmp.le.s32.totalorder 1, %s15
      %p132 = scmp.lt.s32.totalorder %s15, 5
      %p133 = pnand %p131, %p132
      %p134 = pneg %p133
      // Predicated region
      $region9: #{tpu_custom_call.1} parent=5 // pred_check
        _
      $region10: #{tpu_custom_call.1} parent=5 // pred_check_branch
        %136 = sbr.rel (%p133) target = $region12
      $region11: #{tpu_custom_call.1} parent=5 // pred_region
        %s137 = ssub.s32 %s15, 1
        // Predicated region
        $region13: #{tpu_custom_call.1} parent=11 // pred_check
          %p138 = pneg %p76
        $region14: #{tpu_custom_call.1} parent=11 // pred_check_branch
          %140 = sbr.rel (%p138) target = $region16
        $region15: #{tpu_custom_call.1} parent=11 // pred_region
          _
        $region16: #{tpu_custom_call.1} parent=11 // pred_fallthru
          _
        // Predicated region
        $region17: #{tpu_custom_call.1} parent=11 // pred_check
          %p141 = pneg %p97
        $region18: #{tpu_custom_call.1} parent=11 // pred_check_branch
          %143 = sbr.rel (%p141) target = $region20
        $region19: #{tpu_custom_call.1} parent=11 // pred_region
          _
        $region20: #{tpu_custom_call.1} parent=11 // pred_fallthru
          _
      $region12: #{tpu_custom_call.1} parent=5 // pred_fallthru
        _
      %p144 = scmp.lt.s32.totalorder %s15, 4
      // Predicated region
      $region21: #{tpu_custom_call.1} parent=5 // pred_check
        %p145 = pneg %p144
      $region22: #{tpu_custom_call.1} parent=5 // pred_check_branch
        %147 = sbr.rel (%p145) target = $region24
      $region23: #{tpu_custom_call.1} parent=5 // pred_region
        // Predicated region
        $region25: #{tpu_custom_call.1} parent=23 // pred_check
          %p148 = pneg %p49
        $region26: #{tpu_custom_call.1} parent=23 // pred_check_branch
          %150 = sbr.rel (%p148) target = $region28
        $region27: #{tpu_custom_call.1} parent=23 // pred_region
          %s151 = sand.u32 %s39, 1
          %s152 = scalar_lea.sflag [#allocation5], %s151
          %s153 = sand.u32 %s39, 1
          %s154 = smul.addr %s153, 256
          %s155 = scalar_lea.vmem [#allocation4], %s154
          %s156 = smul.u32 8, %s22
          %s158 = ssub.s32 4096, 4096
          %159 = vsyncadd %s152, %s158
          %s160 = smul.addr %s156, 8
          %s161 = sadd.s32 %s23, %s160
          %s162 = smul.addr %s161, 128
          %s163 = scalar_lea.hbm %s0, %s162
          %s164 = sshll.u32 %s155, 4
          %s165 = int_to_ptr.vmem [resolvable:$true] %s164
          %170 = dma.hbm_to_vmem [thread:$0]  %s163, 4096, %s165, %s152, 256, 128, 8
        $region28: #{tpu_custom_call.1} parent=23 // pred_fallthru
          _
      $region24: #{tpu_custom_call.1} parent=5 // pred_fallthru
        _
      %p171 = scmp.le.s32.totalorder 1, %s15
      %p172 = scmp.lt.s32.totalorder %s15, 5
      %p173 = pnand %p171, %p172
      %p174 = pneg %p173
      // Predicated region
      $region29: #{tpu_custom_call.1} parent=5 // pred_check
        _
      $region30: #{tpu_custom_call.1} parent=5 // pred_check_branch
        %176 = sbr.rel (%p173) target = $region32
      $region31: #{tpu_custom_call.1} parent=5 // pred_region
        %s177 = ssub.s32 %s15, 1
        %s178 = sand.u32 %s42, 1
        %s179 = scalar_lea.sflag [#allocation5], %s178
        %s180 = sand.u32 %s42, 1
        %s181 = smul.addr %s180, 256
        %s182 = scalar_lea.vmem [#allocation4], %s181
        // Predicated region
        $region33: #{tpu_custom_call.1} parent=31 // pred_check
          %p183 = pneg %p55
        $region34: #{tpu_custom_call.1} parent=31 // pred_check_branch
          %185 = sbr.rel (%p183) target = $region36
        $region35: #{tpu_custom_call.1} parent=31 // pred_region
          %186 = dma.done %s179, 4096
        $region36: #{tpu_custom_call.1} parent=31 // pred_fallthru
          _
        %s187 = sand.u32 %s42, 1
        %s188 = scalar_lea.sflag [#allocation5], %s187
        %s189 = sand.u32 %s42, 1
        %s190 = smul.addr %s189, 256
        %s191 = scalar_lea.vmem [#allocation4], %s190
        %p192 = pneg %p55
        %p193 = pneg %p52
        %p194 = pneg %p76
        %p195 = pneg %p73
        %p196 = pneg %p97
        %p197 = pneg %p94
        %p198 = pneg %p123
        %p199 = pneg %p120
        %s200 = sand.u32 %s110, 1
        %s201 = scalar_lea.sflag [#allocation6], %s200
        %s202 = sand.u32 %s110, 1
        %s203 = smul.addr %s202, 8
        %s204 = scalar_lea.vmem [#allocation7], %s203
        %s205 = smul.u32 8, %s24
        %p206 = scmp.eq.s32.totalorder %s25, 0
        // Predicated region
        $region37: #{tpu_custom_call.1} parent=31 // pred_check
          %p207 = pneg %p206
        $region38: #{tpu_custom_call.1} parent=31 // pred_check_branch
          %209 = sbr.rel (%p207) target = $region40
        $region39: #{tpu_custom_call.1} parent=31 // pred_region
          %vm210 = vcmask 261120
          %211 = vst.msk [vmem:[#allocation2] sm:$0xff] %vm210, 0.0
          %212 = vst.msk [vmem:[#allocation3] sm:$0xff] %vm210, -inf
        $region40: #{tpu_custom_call.1} parent=31 // pred_fallthru
          _
        %v213 = vld [vmem:[%s182] sm:$0xff]
        %v214 = vld [vmem:[%s182 + $0x8] sm:$0xff]
        %v215 = vld [vmem:[%s182 + $0x10] sm:$0xff]
        %v216 = vld [vmem:[%s182 + $0x18] sm:$0xff]
        %v217 = vld [vmem:[%s182 + $0x20] sm:$0xff]
        %v218 = vld [vmem:[%s182 + $0x28] sm:$0xff]
        %v219 = vld [vmem:[%s182 + $0x30] sm:$0xff]
        %v220 = vld [vmem:[%s182 + $0x38] sm:$0xff]
        %v221 = vld [vmem:[%s182 + $0x40] sm:$0xff]
        %v222 = vld [vmem:[%s182 + $0x48] sm:$0xff]
        %v223 = vld [vmem:[%s182 + $0x50] sm:$0xff]
        %v224 = vld [vmem:[%s182 + $0x58] sm:$0xff]
        %v225 = vld [vmem:[%s182 + $0x60] sm:$0xff]
        %v226 = vld [vmem:[%s182 + $0x68] sm:$0xff]
        %v227 = vld [vmem:[%s182 + $0x70] sm:$0xff]
        %v228 = vld [vmem:[%s182 + $0x78] sm:$0xff]
        %v229 = vld [vmem:[%s182 + $0x80] sm:$0xff]
        %v230 = vld [vmem:[%s182 + $0x88] sm:$0xff]
        %v231 = vld [vmem:[%s182 + $0x90] sm:$0xff]
        %v232 = vld [vmem:[%s182 + $0x98] sm:$0xff]
        %v233 = vld [vmem:[%s182 + $0xa0] sm:$0xff]
        %v234 = vld [vmem:[%s182 + $0xa8] sm:$0xff]
        %v235 = vld [vmem:[%s182 + $0xb0] sm:$0xff]
        %v236 = vld [vmem:[%s182 + $0xb8] sm:$0xff]
        %v237 = vld [vmem:[%s182 + $0xc0] sm:$0xff]
        %v238 = vld [vmem:[%s182 + $0xc8] sm:$0xff]
        %v239 = vld [vmem:[%s182 + $0xd0] sm:$0xff]
        %v240 = vld [vmem:[%s182 + $0xd8] sm:$0xff]
        %v241 = vld [vmem:[%s182 + $0xe0] sm:$0xff]
        %v242 = vld [vmem:[%s182 + $0xe8] sm:$0xff]
        %v243 = vld [vmem:[%s182 + $0xf0] sm:$0xff]
        %v244 = vld [vmem:[%s182 + $0xf8] sm:$0xff]
        %v245 = vld [vmem:[#allocation2] sm:$0xff]
        %246 = vadd.xlane.f32.xlu0 %v213
        %v247 = vpop.xlane.xlu0 %246
        %248 = vadd.xlane.f32.xlu0 %v214
        %v249 = vpop.xlane.xlu0 %248
        %250 = vadd.xlane.f32.xlu0 %v215
        %v251 = vpop.xlane.xlu0 %250
        %252 = vadd.xlane.f32.xlu0 %v216
        %v253 = vpop.xlane.xlu0 %252
        %254 = vadd.xlane.f32.xlu0 %v217
        %v255 = vpop.xlane.xlu0 %254
        %256 = vadd.xlane.f32.xlu0 %v218
        %v257 = vpop.xlane.xlu0 %256
        %258 = vadd.xlane.f32.xlu0 %v219
        %v259 = vpop.xlane.xlu0 %258
        %260 = vadd.xlane.f32.xlu0 %v220
        %v261 = vpop.xlane.xlu0 %260
        %262 = vadd.xlane.f32.xlu0 %v221
        %v263 = vpop.xlane.xlu0 %262
        %264 = vadd.xlane.f32.xlu0 %v222
        %v265 = vpop.xlane.xlu0 %264
        %266 = vadd.xlane.f32.xlu0 %v223
        %v267 = vpop.xlane.xlu0 %266
        %268 = vadd.xlane.f32.xlu0 %v224
        %v269 = vpop.xlane.xlu0 %268
        %270 = vadd.xlane.f32.xlu0 %v225
        %v271 = vpop.xlane.xlu0 %270
        %272 = vadd.xlane.f32.xlu0 %v226
        %v273 = vpop.xlane.xlu0 %272
        %274 = vadd.xlane.f32.xlu0 %v227
        %v275 = vpop.xlane.xlu0 %274
        %276 = vadd.xlane.f32.xlu0 %v228
        %v277 = vpop.xlane.xlu0 %276
        %278 = vadd.xlane.f32.xlu0 %v229
        %v279 = vpop.xlane.xlu0 %278
        %280 = vadd.xlane.f32.xlu0 %v230
        %v281 = vpop.xlane.xlu0 %280
        %282 = vadd.xlane.f32.xlu0 %v231
        %v283 = vpop.xlane.xlu0 %282
        %284 = vadd.xlane.f32.xlu0 %v232
        %v285 = vpop.xlane.xlu0 %284
        %286 = vadd.xlane.f32.xlu0 %v233
        %v287 = vpop.xlane.xlu0 %286
        %288 = vadd.xlane.f32.xlu0 %v234
        %v289 = vpop.xlane.xlu0 %288
        %290 = vadd.xlane.f32.xlu0 %v235
        %v291 = vpop.xlane.xlu0 %290
        %292 = vadd.xlane.f32.xlu0 %v236
        %v293 = vpop.xlane.xlu0 %292
        %294 = vadd.xlane.f32.xlu0 %v237
        %v295 = vpop.xlane.xlu0 %294
        %296 = vadd.xlane.f32.xlu0 %v238
        %v297 = vpop.xlane.xlu0 %296
        %298 = vadd.xlane.f32.xlu0 %v239
        %v299 = vpop.xlane.xlu0 %298
        %300 = vadd.xlane.f32.xlu0 %v240
        %v301 = vpop.xlane.xlu0 %300
        %302 = vadd.xlane.f32.xlu0 %v241
        %v303 = vpop.xlane.xlu0 %302
        %304 = vadd.xlane.f32.xlu0 %v242
        %v305 = vpop.xlane.xlu0 %304
        %306 = vadd.xlane.f32.xlu0 %v243
        %v307 = vpop.xlane.xlu0 %306
        %308 = vadd.xlane.f32.xlu0 %v244
        %v309 = vpop.xlane.xlu0 %308
        %v342 = vlaneseq
        %v343 = vand.u32 %v342, 127
        %v344 = vlaneseq
        %v345 = vshrl.u32 %v344, 7
        %v346 = vsub.s32 %v343, %v345
        %v347 = vrot.slane %v247, %v346
        %v348 = vadd.s32 %v343, 4294967288
        %v349 = vlaneseq
        %v350 = vshrl.u32 %v349, 7
        %v351 = vsub.s32 %v348, %v350
        %v352 = vrot.slane %v249, %v351
        %vm353 = vcmask 130112
        %v354 = vsel %vm353, %v352, %v347
        %v355 = vadd.s32 %v343, 4294967280
        %v356 = vlaneseq
        %v357 = vshrl.u32 %v356, 7
        %v358 = vsub.s32 %v355, %v357
        %v359 = vrot.slane %v251, %v358
        %vm360 = vcmask 195712
        %v361 = vsel %vm360, %v359, %v354
        %v362 = vadd.s32 %v343, 4294967272
        %v363 = vlaneseq
        %v364 = vshrl.u32 %v363, 7
        %v365 = vsub.s32 %v362, %v364
        %v366 = vrot.slane %v253, %v365
        %vm367 = vcmask 261312
        %v368 = vsel %vm367, %v366, %v361
        %v369 = vlaneseq
        %v370 = vshrl.u32 %v369, 7
        %v371 = vsub.s32 %v343, %v370
        %v372 = vrot.slane %v255, %v371
        %v373 = vlaneseq
        %v374 = vshrl.u32 %v373, 7
        %v375 = vsub.s32 %v348, %v374
        %v376 = vrot.slane %v257, %v375
        %v377 = vsel %vm353, %v376, %v372
        %v378 = vlaneseq
        %v379 = vshrl.u32 %v378, 7
        %v380 = vsub.s32 %v355, %v379
        %v381 = vrot.slane %v259, %v380
        %v382 = vsel %vm360, %v381, %v377
        %v383 = vlaneseq
        %v384 = vshrl.u32 %v383, 7
        %v385 = vsub.s32 %v362, %v384
        %v386 = vrot.slane %v261, %v385
        %v387 = vsel %vm367, %v386, %v382
        %v388 = vlaneseq
        %v389 = vshrl.u32 %v388, 7
        %v390 = vsub.s32 %v343, %v389
        %v391 = vrot.slane %v263, %v390
        %v392 = vlaneseq
        %v393 = vshrl.u32 %v392, 7
        %v394 = vsub.s32 %v348, %v393
        %v395 = vrot.slane %v265, %v394
        %v396 = vsel %vm353, %v395, %v391
        %v397 = vlaneseq
        %v398 = vshrl.u32 %v397, 7
        %v399 = vsub.s32 %v355, %v398
        %v400 = vrot.slane %v267, %v399
        %v401 = vsel %vm360, %v400, %v396
        %v402 = vlaneseq
        %v403 = vshrl.u32 %v402, 7
        %v404 = vsub.s32 %v362, %v403
        %v405 = vrot.slane %v269, %v404
        %v406 = vsel %vm367, %v405, %v401
        %v407 = vlaneseq
        %v408 = vshrl.u32 %v407, 7
        %v409 = vsub.s32 %v343, %v408
        %v410 = vrot.slane %v271, %v409
        %v411 = vlaneseq
        %v412 = vshrl.u32 %v411, 7
        %v413 = vsub.s32 %v348, %v412
        %v414 = vrot.slane %v273, %v413
        %v415 = vsel %vm353, %v414, %v410
        %v416 = vlaneseq
        %v417 = vshrl.u32 %v416, 7
        %v418 = vsub.s32 %v355, %v417
        %v419 = vrot.slane %v275, %v418
        %v420 = vsel %vm360, %v419, %v415
        %v421 = vlaneseq
        %v422 = vshrl.u32 %v421, 7
        %v423 = vsub.s32 %v362, %v422
        %v424 = vrot.slane %v277, %v423
        %v425 = vsel %vm367, %v424, %v420
        %v426 = vlaneseq
        %v427 = vshrl.u32 %v426, 7
        %v428 = vsub.s32 %v343, %v427
        %v429 = vrot.slane %v279, %v428
        %v430 = vlaneseq
        %v431 = vshrl.u32 %v430, 7
        %v432 = vsub.s32 %v348, %v431
        %v433 = vrot.slane %v281, %v432
        %v434 = vsel %vm353, %v433, %v429
        %v435 = vlaneseq
        %v436 = vshrl.u32 %v435, 7
        %v437 = vsub.s32 %v355, %v436
        %v438 = vrot.slane %v283, %v437
        %v439 = vsel %vm360, %v438, %v434
        %v440 = vlaneseq
        %v441 = vshrl.u32 %v440, 7
        %v442 = vsub.s32 %v362, %v441
        %v443 = vrot.slane %v285, %v442
        %v444 = vsel %vm367, %v443, %v439
        %v445 = vlaneseq
        %v446 = vshrl.u32 %v445, 7
        %v447 = vsub.s32 %v343, %v446
        %v448 = vrot.slane %v287, %v447
        %v449 = vlaneseq
        %v450 = vshrl.u32 %v449, 7
        %v451 = vsub.s32 %v348, %v450
        %v452 = vrot.slane %v289, %v451
        %v453 = vsel %vm353, %v452, %v448
        %v454 = vlaneseq
        %v455 = vshrl.u32 %v454, 7
        %v456 = vsub.s32 %v355, %v455
        %v457 = vrot.slane %v291, %v456
        %v458 = vsel %vm360, %v457, %v453
        %v459 = vlaneseq
        %v460 = vshrl.u32 %v459, 7
        %v461 = vsub.s32 %v362, %v460
        %v462 = vrot.slane %v293, %v461
        %v463 = vsel %vm367, %v462, %v458
        %v464 = vlaneseq
        %v465 = vshrl.u32 %v464, 7
        %v466 = vsub.s32 %v343, %v465
        %v467 = vrot.slane %v295, %v466
        %v468 = vlaneseq
        %v469 = vshrl.u32 %v468, 7
        %v470 = vsub.s32 %v348, %v469
        %v471 = vrot.slane %v297, %v470
        %v472 = vsel %vm353, %v471, %v467
        %v473 = vlaneseq
        %v474 = vshrl.u32 %v473, 7
        %v475 = vsub.s32 %v355, %v474
        %v476 = vrot.slane %v299, %v475
        %v477 = vsel %vm360, %v476, %v472
        %v478 = vlaneseq
        %v479 = vshrl.u32 %v478, 7
        %v480 = vsub.s32 %v362, %v479
        %v481 = vrot.slane %v301, %v480
        %v482 = vsel %vm367, %v481, %v477
        %v483 = vlaneseq
        %v484 = vshrl.u32 %v483, 7
        %v485 = vsub.s32 %v343, %v484
        %v486 = vrot.slane %v303, %v485
        %v487 = vlaneseq
        %v488 = vshrl.u32 %v487, 7
        %v489 = vsub.s32 %v348, %v488
        %v490 = vrot.slane %v305, %v489
        %v491 = vsel %vm353, %v490, %v486
        %v492 = vlaneseq
        %v493 = vshrl.u32 %v492, 7
        %v494 = vsub.s32 %v355, %v493
        %v495 = vrot.slane %v307, %v494
        %v496 = vsel %vm360, %v495, %v491
        %v497 = vlaneseq
        %v498 = vshrl.u32 %v497, 7
        %v499 = vsub.s32 %v362, %v498
        %v500 = vrot.slane %v309, %v499
        %v501 = vsel %vm367, %v500, %v496
        %vm502 = vcmask 1041409
        %v503 = vsel %vm502, %v387, %v368
        %vm504 = vcmask 1042434
        %v505 = vsel %vm504, %v406, %v503
        %vm506 = vcmask 1043459
        %v507 = vsel %vm506, %v425, %v505
        %vm508 = vcmask 1044484
        %v509 = vsel %vm508, %v444, %v507
        %vm510 = vcmask 1045509
        %v511 = vsel %vm510, %v463, %v509
        %vm512 = vcmask 1046534
        %v513 = vsel %vm512, %v482, %v511
        %vm514 = vcmask 1047559
        %v515 = vsel %vm514, %v501, %v513
        %v517 = vadd.f32 %v245, %v515
        %vm518 = vcmask 261120
        %519 = vst.msk [vmem:[#allocation2] sm:$0xff] %vm518, %v517
        %s520 = smul.u32 %s25, 128
        %v521 = vstv %s520
        %v522 = vadd.s32 %v521, %v343
        %vm523 = vcmp.lt.s32.totalorder %v522, 196
        %v524 = vsel %vm523, %v213, -inf
        %v525 = vsel %vm523, %v214, -inf
        %v526 = vsel %vm523, %v215, -inf
        %v527 = vsel %vm523, %v216, -inf
        %v528 = vsel %vm523, %v217, -inf
        %v529 = vsel %vm523, %v218, -inf
        %v530 = vsel %vm523, %v219, -inf
        %v531 = vsel %vm523, %v220, -inf
        %v532 = vsel %vm523, %v221, -inf
        %v533 = vsel %vm523, %v222, -inf
        %v534 = vsel %vm523, %v223, -inf
        %v535 = vsel %vm523, %v224, -inf
        %v536 = vsel %vm523, %v225, -inf
        %v537 = vsel %vm523, %v226, -inf
        %v538 = vsel %vm523, %v227, -inf
        %v539 = vsel %vm523, %v228, -inf
        %v540 = vsel %vm523, %v229, -inf
        %v541 = vsel %vm523, %v230, -inf
        %v542 = vsel %vm523, %v231, -inf
        %v543 = vsel %vm523, %v232, -inf
        %v544 = vsel %vm523, %v233, -inf
        %v545 = vsel %vm523, %v234, -inf
        %v546 = vsel %vm523, %v235, -inf
        %v547 = vsel %vm523, %v236, -inf
        %v548 = vsel %vm523, %v237, -inf
        %v549 = vsel %vm523, %v238, -inf
        %v550 = vsel %vm523, %v239, -inf
        %v551 = vsel %vm523, %v240, -inf
        %v552 = vsel %vm523, %v241, -inf
        %v553 = vsel %vm523, %v242, -inf
        %v554 = vsel %vm523, %v243, -inf
        %v555 = vsel %vm523, %v244, -inf
        %v556 = vld [vmem:[#allocation3] sm:$0xff]
        %557 = vmax.xlane.f32.xlu0 %v524
        %v558 = vpop.xlane.xlu0 %557
        %559 = vmax.xlane.f32.xlu0 %v525
        %v560 = vpop.xlane.xlu0 %559
        %561 = vmax.xlane.f32.xlu0 %v526
        %v562 = vpop.xlane.xlu0 %561
        %563 = vmax.xlane.f32.xlu0 %v527
        %v564 = vpop.xlane.xlu0 %563
        %565 = vmax.xlane.f32.xlu0 %v528
        %v566 = vpop.xlane.xlu0 %565
        %567 = vmax.xlane.f32.xlu0 %v529
        %v568 = vpop.xlane.xlu0 %567
        %569 = vmax.xlane.f32.xlu0 %v530
        %v570 = vpop.xlane.xlu0 %569
        %571 = vmax.xlane.f32.xlu0 %v531
        %v572 = vpop.xlane.xlu0 %571
        %573 = vmax.xlane.f32.xlu0 %v532
        %v574 = vpop.xlane.xlu0 %573
        %575 = vmax.xlane.f32.xlu0 %v533
        %v576 = vpop.xlane.xlu0 %575
        %577 = vmax.xlane.f32.xlu0 %v534
        %v578 = vpop.xlane.xlu0 %577
        %579 = vmax.xlane.f32.xlu0 %v535
        %v580 = vpop.xlane.xlu0 %579
        %581 = vmax.xlane.f32.xlu0 %v536
        %v582 = vpop.xlane.xlu0 %581
        %583 = vmax.xlane.f32.xlu0 %v537
        %v584 = vpop.xlane.xlu0 %583
        %585 = vmax.xlane.f32.xlu0 %v538
        %v586 = vpop.xlane.xlu0 %585
        %587 = vmax.xlane.f32.xlu0 %v539
        %v588 = vpop.xlane.xlu0 %587
        %589 = vmax.xlane.f32.xlu0 %v540
        %v590 = vpop.xlane.xlu0 %589
        %591 = vmax.xlane.f32.xlu0 %v541
        %v592 = vpop.xlane.xlu0 %591
        %593 = vmax.xlane.f32.xlu0 %v542
        %v594 = vpop.xlane.xlu0 %593
        %595 = vmax.xlane.f32.xlu0 %v543
        %v596 = vpop.xlane.xlu0 %595
        %597 = vmax.xlane.f32.xlu0 %v544
        %v598 = vpop.xlane.xlu0 %597
        %599 = vmax.xlane.f32.xlu0 %v545
        %v600 = vpop.xlane.xlu0 %599
        %601 = vmax.xlane.f32.xlu0 %v546
        %v602 = vpop.xlane.xlu0 %601
        %603 = vmax.xlane.f32.xlu0 %v547
        %v604 = vpop.xlane.xlu0 %603
        %605 = vmax.xlane.f32.xlu0 %v548
        %v606 = vpop.xlane.xlu0 %605
        %607 = vmax.xlane.f32.xlu0 %v549
        %v608 = vpop.xlane.xlu0 %607
        %609 = vmax.xlane.f32.xlu0 %v550
        %v610 = vpop.xlane.xlu0 %609
        %611 = vmax.xlane.f32.xlu0 %v551
        %v612 = vpop.xlane.xlu0 %611
        %613 = vmax.xlane.f32.xlu0 %v552
        %v614 = vpop.xlane.xlu0 %613
        %615 = vmax.xlane.f32.xlu0 %v553
        %v616 = vpop.xlane.xlu0 %615
        %617 = vmax.xlane.f32.xlu0 %v554
        %v618 = vpop.xlane.xlu0 %617
        %619 = vmax.xlane.f32.xlu0 %v555
        %v620 = vpop.xlane.xlu0 %619
        %v653 = vlaneseq
        %v654 = vshrl.u32 %v653, 7
        %v655 = vsub.s32 %v343, %v654
        %v656 = vrot.slane %v558, %v655
        %v657 = vlaneseq
        %v658 = vshrl.u32 %v657, 7
        %v659 = vsub.s32 %v348, %v658
        %v660 = vrot.slane %v560, %v659
        %v661 = vsel %vm353, %v660, %v656
        %v662 = vlaneseq
        %v663 = vshrl.u32 %v662, 7
        %v664 = vsub.s32 %v355, %v663
        %v665 = vrot.slane %v562, %v664
        %v666 = vsel %vm360, %v665, %v661
        %v667 = vlaneseq
        %v668 = vshrl.u32 %v667, 7
        %v669 = vsub.s32 %v362, %v668
        %v670 = vrot.slane %v564, %v669
        %v671 = vsel %vm367, %v670, %v666
        %v672 = vlaneseq
        %v673 = vshrl.u32 %v672, 7
        %v674 = vsub.s32 %v343, %v673
        %v675 = vrot.slane %v566, %v674
        %v676 = vlaneseq
        %v677 = vshrl.u32 %v676, 7
        %v678 = vsub.s32 %v348, %v677
        %v679 = vrot.slane %v568, %v678
        %v680 = vsel %vm353, %v679, %v675
        %v681 = vlaneseq
        %v682 = vshrl.u32 %v681, 7
        %v683 = vsub.s32 %v355, %v682
        %v684 = vrot.slane %v570, %v683
        %v685 = vsel %vm360, %v684, %v680
        %v686 = vlaneseq
        %v687 = vshrl.u32 %v686, 7
        %v688 = vsub.s32 %v362, %v687
        %v689 = vrot.slane %v572, %v688
        %v690 = vsel %vm367, %v689, %v685
        %v691 = vlaneseq
        %v692 = vshrl.u32 %v691, 7
        %v693 = vsub.s32 %v343, %v692
        %v694 = vrot.slane %v574, %v693
        %v695 = vlaneseq
        %v696 = vshrl.u32 %v695, 7
        %v697 = vsub.s32 %v348, %v696
        %v698 = vrot.slane %v576, %v697
        %v699 = vsel %vm353, %v698, %v694
        %v700 = vlaneseq
        %v701 = vshrl.u32 %v700, 7
        %v702 = vsub.s32 %v355, %v701
        %v703 = vrot.slane %v578, %v702
        %v704 = vsel %vm360, %v703, %v699
        %v705 = vlaneseq
        %v706 = vshrl.u32 %v705, 7
        %v707 = vsub.s32 %v362, %v706
        %v708 = vrot.slane %v580, %v707
        %v709 = vsel %vm367, %v708, %v704
        %v710 = vlaneseq
        %v711 = vshrl.u32 %v710, 7
        %v712 = vsub.s32 %v343, %v711
        %v713 = vrot.slane %v582, %v712
        %v714 = vlaneseq
        %v715 = vshrl.u32 %v714, 7
        %v716 = vsub.s32 %v348, %v715
        %v717 = vrot.slane %v584, %v716
        %v718 = vsel %vm353, %v717, %v713
        %v719 = vlaneseq
        %v720 = vshrl.u32 %v719, 7
        %v721 = vsub.s32 %v355, %v720
        %v722 = vrot.slane %v586, %v721
        %v723 = vsel %vm360, %v722, %v718
        %v724 = vlaneseq
        %v725 = vshrl.u32 %v724, 7
        %v726 = vsub.s32 %v362, %v725
        %v727 = vrot.slane %v588, %v726
        %v728 = vsel %vm367, %v727, %v723
        %v729 = vlaneseq
        %v730 = vshrl.u32 %v729, 7
        %v731 = vsub.s32 %v343, %v730
        %v732 = vrot.slane %v590, %v731
        %v733 = vlaneseq
        %v734 = vshrl.u32 %v733, 7
        %v735 = vsub.s32 %v348, %v734
        %v736 = vrot.slane %v592, %v735
        %v737 = vsel %vm353, %v736, %v732
        %v738 = vlaneseq
        %v739 = vshrl.u32 %v738, 7
        %v740 = vsub.s32 %v355, %v739
        %v741 = vrot.slane %v594, %v740
        %v742 = vsel %vm360, %v741, %v737
        %v743 = vlaneseq
        %v744 = vshrl.u32 %v743, 7
        %v745 = vsub.s32 %v362, %v744
        %v746 = vrot.slane %v596, %v745
        %v747 = vsel %vm367, %v746, %v742
        %v748 = vlaneseq
        %v749 = vshrl.u32 %v748, 7
        %v750 = vsub.s32 %v343, %v749
        %v751 = vrot.slane %v598, %v750
        %v752 = vlaneseq
        %v753 = vshrl.u32 %v752, 7
        %v754 = vsub.s32 %v348, %v753
        %v755 = vrot.slane %v600, %v754
        %v756 = vsel %vm353, %v755, %v751
        %v757 = vlaneseq
        %v758 = vshrl.u32 %v757, 7
        %v759 = vsub.s32 %v355, %v758
        %v760 = vrot.slane %v602, %v759
        %v761 = vsel %vm360, %v760, %v756
        %v762 = vlaneseq
        %v763 = vshrl.u32 %v762, 7
        %v764 = vsub.s32 %v362, %v763
        %v765 = vrot.slane %v604, %v764
        %v766 = vsel %vm367, %v765, %v761
        %v767 = vlaneseq
        %v768 = vshrl.u32 %v767, 7
        %v769 = vsub.s32 %v343, %v768
        %v770 = vrot.slane %v606, %v769
        %v771 = vlaneseq
        %v772 = vshrl.u32 %v771, 7
        %v773 = vsub.s32 %v348, %v772
        %v774 = vrot.slane %v608, %v773
        %v775 = vsel %vm353, %v774, %v770
        %v776 = vlaneseq
        %v777 = vshrl.u32 %v776, 7
        %v778 = vsub.s32 %v355, %v777
        %v779 = vrot.slane %v610, %v778
        %v780 = vsel %vm360, %v779, %v775
        %v781 = vlaneseq
        %v782 = vshrl.u32 %v781, 7
        %v783 = vsub.s32 %v362, %v782
        %v784 = vrot.slane %v612, %v783
        %v785 = vsel %vm367, %v784, %v780
        %v786 = vlaneseq
        %v787 = vshrl.u32 %v786, 7
        %v788 = vsub.s32 %v343, %v787
        %v789 = vrot.slane %v614, %v788
        %v790 = vlaneseq
        %v791 = vshrl.u32 %v790, 7
        %v792 = vsub.s32 %v348, %v791
        %v793 = vrot.slane %v616, %v792
        %v794 = vsel %vm353, %v793, %v789
        %v795 = vlaneseq
        %v796 = vshrl.u32 %v795, 7
        %v797 = vsub.s32 %v355, %v796
        %v798 = vrot.slane %v618, %v797
        %v799 = vsel %vm360, %v798, %v794
        %v800 = vlaneseq
        %v801 = vshrl.u32 %v800, 7
        %v802 = vsub.s32 %v362, %v801
        %v803 = vrot.slane %v620, %v802
        %v804 = vsel %vm367, %v803, %v799
        %v805 = vsel %vm502, %v690, %v671
        %v806 = vsel %vm504, %v709, %v805
        %v807 = vsel %vm506, %v728, %v806
        %v808 = vsel %vm508, %v747, %v807
        %v809 = vsel %vm510, %v766, %v808
        %v810 = vsel %vm512, %v785, %v809
        %v811 = vsel %vm514, %v804, %v810
        %v813 = vmax.f32 %v556, %v811
        %814 = vst.msk [vmem:[#allocation3] sm:$0xff] %vm518, %v813
        %p815 = scmp.eq.s32.totalorder %s25, 1
        // Predicated region
        $region41: #{tpu_custom_call.1} parent=31 // pred_check
          %p816 = pneg %p815
        $region42: #{tpu_custom_call.1} parent=31 // pred_check_branch
          %818 = sbr.rel (%p816) target = $region44
        $region43: #{tpu_custom_call.1} parent=31 // pred_region
          %v819 = vld [vmem:[#allocation2] sm:$0xff]
          %v820 = vmul.f32 %v819, 0.0051020407
          %v821 = vld [vmem:[#allocation3] sm:$0xff]
          %v822 = vld [vmem:[%s1] sm:$0xff]
          %v823 = vld [vmem:[%s1 + $0x8] sm:$0xff]
          %v824 = vld [vmem:[%s1 + $0x10] sm:$0xff]
          %v825 = vld [vmem:[%s1 + $0x18] sm:$0xff]
          %v826 = vld [vmem:[%s2] sm:$0x3]
          %v828 = vsel %vm518, %v820, 0
          %v831 = vsel %vm518, %v821, 0
          %833 = vmatprep.subr.mxu0 0.0
          %834 = vmatpush1.msra.mxu0 0.0
          %835 = vmatprep.subr.mxu0 0.0
          %836 = vmatpush1.msra.mxu0 0.0
          %837 = vmatprep.subr.mxu0 0.0
          %838 = vmatpush1.msra.mxu0 0.0
          %839 = vmatprep.subr.mxu0 0.0
          %840 = vmatpush1.msra.mxu0 0.0
          %841 = vmatprep.subr.mxu0 0.0
          %842 = vmatpush1.msra.mxu0 0.0
          %843 = vmatprep.subr.mxu0 0.0
          %844 = vmatpush1.msra.mxu0 0.0
          %845 = vmatprep.subr.mxu0 0.0
          %846 = vmatpush1.msra.mxu0 0.0
          %847 = vmatprep.subr.mxu0 0.0
          %848 = vmatpush1.msra.mxu0 0.0
          %849 = vmatprep.subr.mxu0 0.0
          %850 = vmatpush1.msra.mxu0 0.0
          %851 = vmatprep.subr.mxu0 0.0
          %852 = vmatpush1.msra.mxu0 0.0
          %853 = vmatprep.subr.mxu0 0.0
          %854 = vmatpush1.msra.mxu0 0.0
          %855 = vmatprep.subr.mxu0 0.0
          %856 = vmatpush1.msra.mxu0 0.0
          %857 = vmatprep.subr.mxu0 0.0
          %858 = vmatpush1.msra.mxu0 %v825
          %859 = vmatprep.subr.mxu0 0.0
          %860 = vmatpush1.msra.mxu0 %v824
          %861 = vmatprep.subr.mxu0 0.0
          %862 = vmatpush1.msra.mxu0 %v823
          %863 = vmatprep.subr.mxu0 0.0
          %864 = vmatpush1.msra.mxu0 %v822
          %865 = vmatprep.subr.mxu0 0.0
          %866 = vmatpush2.msra.mxu0 0.0
          %867 = vmatprep.subr.mxu0 0.0
          %868 = vmatpush2.msra.mxu0 0.0
          %869 = vmatprep.subr.mxu0 0.0
          %870 = vmatpush2.msra.mxu0 0.0
          %871 = vmatprep.subr.mxu0 0.0
          %872 = vmatpush2.msra.mxu0 0.0
          %873 = vmatprep.subr.mxu0 0.0
          %874 = vmatpush2.msra.mxu0 0.0
          %875 = vmatprep.subr.mxu0 0.0
          %876 = vmatpush2.msra.mxu0 0.0
          %877 = vmatprep.subr.mxu0 0.0
          %878 = vmatpush2.msra.mxu0 0.0
          %879 = vmatprep.subr.mxu0 0.0
          %880 = vmatpush2.msra.mxu0 0.0
          %881 = vmatprep.subr.mxu0 0.0
          %882 = vmatpush2.msra.mxu0 0.0
          %883 = vmatprep.subr.mxu0 0.0
          %884 = vmatpush2.msra.mxu0 0.0
          %885 = vmatprep.subr.mxu0 0.0
          %886 = vmatpush2.msra.mxu0 0.0
          %887 = vmatprep.subr.mxu0 0.0
          %888 = vmatpush2.msra.mxu0 0.0
          %889 = vmatprep.subr.mxu0 0.0
          %890 = vmatpush2.msra.mxu0 0.0
          %891 = vmatprep.subr.mxu0 0.0
          %892 = vmatpush2.msra.mxu0 0.0
          %893 = vmatprep.subr.mxu0 0.0
          %894 = vmatpush2.msra.mxu0 0.0
          %895 = vmatprep.subr.mxu0 0.0
          %896 = vmatpush2.msra.mxu0 0.0
          %897 = vmatprep.mubr.f32.mxu0 0.0
          %898 = vmatmul.mubr.f32.gmra.mxu0 %v828
          %v899 = vpop.f32.mrf.mxu0
          %v900 = vadd.f32 0.0, %v899
          %v901 = vpop.f32.mrf.mxu0
          %902 = vmatprep.mubr.f32.mxu0 0.0
          %903 = vmatmul.mubr.f32.gmra.mxu0 %v831
          %v904 = vpop.f32.mrf.mxu0
          %v905 = vadd.f32 0.0, %v904
          %v906 = vpop.f32.mrf.mxu0
          %907 = vdwg.mxu0
          %v908 = vmax.f32 %v900, 0.0
          %v909 = vmax.f32 %v905, 0.0
          %vm910 = vcmask 15360
          %v912 = vsel %vm910, %v908, 0
          %v915 = vsel %vm910, %v909, 0
          %vm917 = vcmask 1041408
          %v919 = vsel %vm917, %v826, 0
          %921 = vmatprep.subr.mxu0 0.0
          %922 = vmatpush1.msra.mxu0 0.0
          %923 = vmatprep.subr.mxu0 0.0
          %924 = vmatpush1.msra.mxu0 0.0
          %925 = vmatprep.subr.mxu0 0.0
          %926 = vmatpush1.msra.mxu0 0.0
          %927 = vmatprep.subr.mxu0 0.0
          %928 = vmatpush1.msra.mxu0 0.0
          %929 = vmatprep.subr.mxu0 0.0
          %930 = vmatpush1.msra.mxu0 0.0
          %931 = vmatprep.subr.mxu0 0.0
          %932 = vmatpush1.msra.mxu0 0.0
          %933 = vmatprep.subr.mxu0 0.0
          %934 = vmatpush1.msra.mxu0 0.0
          %935 = vmatprep.subr.mxu0 0.0
          %936 = vmatpush1.msra.mxu0 0.0
          %937 = vmatprep.subr.mxu0 0.0
          %938 = vmatpush1.msra.mxu0 0.0
          %939 = vmatprep.subr.mxu0 0.0
          %940 = vmatpush1.msra.mxu0 0.0
          %941 = vmatprep.subr.mxu0 0.0
          %942 = vmatpush1.msra.mxu0 0.0
          %943 = vmatprep.subr.mxu0 0.0
          %944 = vmatpush1.msra.mxu0 0.0
          %945 = vmatprep.subr.mxu0 0.0
          %946 = vmatpush1.msra.mxu0 0.0
          %947 = vmatprep.subr.mxu0 0.0
          %948 = vmatpush1.msra.mxu0 0.0
          %949 = vmatprep.subr.mxu0 0.0
          %950 = vmatpush1.msra.mxu0 0.0
          %951 = vmatprep.subr.mxu0 0.0
          %952 = vmatpush1.msra.mxu0 %v919
          %953 = vmatprep.subr.mxu0 0.0
          %954 = vmatpush2.msra.mxu0 0.0
          %955 = vmatprep.subr.mxu0 0.0
          %956 = vmatpush2.msra.mxu0 0.0
          %957 = vmatprep.subr.mxu0 0.0
          %958 = vmatpush2.msra.mxu0 0.0
          %959 = vmatprep.subr.mxu0 0.0
          %960 = vmatpush2.msra.mxu0 0.0
          %961 = vmatprep.subr.mxu0 0.0
          %962 = vmatpush2.msra.mxu0 0.0
          %963 = vmatprep.subr.mxu0 0.0
          %964 = vmatpush2.msra.mxu0 0.0
          %965 = vmatprep.subr.mxu0 0.0
          %966 = vmatpush2.msra.mxu0 0.0
          %967 = vmatprep.subr.mxu0 0.0
          %968 = vmatpush2.msra.mxu0 0.0
          %969 = vmatprep.subr.mxu0 0.0
          %970 = vmatpush2.msra.mxu0 0.0
          %971 = vmatprep.subr.mxu0 0.0
          %972 = vmatpush2.msra.mxu0 0.0
          %973 = vmatprep.subr.mxu0 0.0
          %974 = vmatpush2.msra.mxu0 0.0
          %975 = vmatprep.subr.mxu0 0.0
          %976 = vmatpush2.msra.mxu0 0.0
          %977 = vmatprep.subr.mxu0 0.0
          %978 = vmatpush2.msra.mxu0 0.0
          %979 = vmatprep.subr.mxu0 0.0
          %980 = vmatpush2.msra.mxu0 0.0
          %981 = vmatprep.subr.mxu0 0.0
          %982 = vmatpush2.msra.mxu0 0.0
          %983 = vmatprep.subr.mxu0 0.0
          %984 = vmatpush2.msra.mxu0 0.0
          %985 = vmatprep.mubr.f32.mxu0 0.0
          %986 = vmatmul.mubr.f32.gmra.mxu0 %v912
          %v987 = vpop.f32.mrf.mxu0
          %v988 = vadd.f32 0.0, %v987
          %v989 = vpop.f32.mrf.mxu0
          %990 = vmatprep.mubr.f32.mxu0 0.0
          %991 = vmatmul.mubr.f32.gmra.mxu0 %v915
          %v992 = vpop.f32.mrf.mxu0
          %v993 = vadd.f32 0.0, %v992
          %v994 = vpop.f32.mrf.mxu0
          %995 = vdwg.mxu0
          %v996 = vadd.f32 %v988, %v993
          %v997 = vxor.u32 %v996, 2147483648
          %v998 = vmul.f32 %v997, 1.442695
          %v999 = vpow.pop %v998
          %v1000 = vadd.f32 %v999, 1.0
          %v1001 = vrcp.pop %v1000
          %v1002 = vmul.f32 1.0, %v1001
          %1003 = vst.msk [vmem:[%s204] sm:$0xff] %vm518, %v1002
        $region44: #{tpu_custom_call.1} parent=31 // pred_fallthru
          _
        %s1004 = sand.u32 %s110, 1
        %s1005 = scalar_lea.sflag [#allocation6], %s1004
        %s1006 = sand.u32 %s110, 1
        %s1007 = smul.addr %s1006, 8
        %s1008 = scalar_lea.vmem [#allocation7], %s1007
        // Predicated region
        $region45: #{tpu_custom_call.1} parent=31 // pred_check
          %p1009 = pneg %p120
        $region46: #{tpu_custom_call.1} parent=31 // pred_check_branch
          %1011 = sbr.rel (%p1009) target = $region48
        $region47: #{tpu_custom_call.1} parent=31 // pred_region
          %s1013 = ssub.s32 128, 128
          %1014 = vsyncadd %s1005, %s1013
          %s1015 = smul.addr %s24, 128
          %s1016 = scalar_lea.hbm %s3, %s1015
          %s1018 = sshll.u32 %s1008, 4
          %s1019 = int_to_ptr.vmem [resolvable:$true] %s1018
          %1021 = dma.vmem_to_hbm [thread:$0]  %s1019, 128, %s1016, %s1005
        $region48: #{tpu_custom_call.1} parent=31 // pred_fallthru
          _
      $region32: #{tpu_custom_call.1} parent=5 // pred_fallthru
        _
      %p1022 = scmp.le.s32.totalorder 2, %s15
      // Predicated region
      $region49: #{tpu_custom_call.1} parent=5 // pred_check
        %p1023 = pneg %p1022
      $region50: #{tpu_custom_call.1} parent=5 // pred_check_branch
        %1025 = sbr.rel (%p1023) target = $region52
      $region51: #{tpu_custom_call.1} parent=5 // pred_region
        %s1026 = ssub.s32 %s15, 2
        // Predicated region
        $region53: #{tpu_custom_call.1} parent=51 // pred_check
          %p1027 = pneg %p126
        $region54: #{tpu_custom_call.1} parent=51 // pred_check_branch
          %1029 = sbr.rel (%p1027) target = $region56
        $region55: #{tpu_custom_call.1} parent=51 // pred_region
          %s1030 = sand.u32 %s111, 1
          %s1031 = scalar_lea.sflag [#allocation6], %s1030
          %s1032 = sand.u32 %s111, 1
          %s1033 = smul.addr %s1032, 8
          %s1034 = scalar_lea.vmem [#allocation7], %s1033
          %1035 = dma.done %s1031, 128
        $region56: #{tpu_custom_call.1} parent=51 // pred_fallthru
          _
      $region52: #{tpu_custom_call.1} parent=5 // pred_fallthru
        _
    $region6: #{tpu_custom_call.1} parent=1 // loop_footer
      %s19 = sadd.s32 1, %s15
    $region7: #{tpu_custom_call.1} parent=1 // loop_footer_branch
      %14 = sbr.rel target = $region3
    $region8: #{tpu_custom_call.1} parent=1 // loop_exit
      _
    %1036 = vsyncpa [#allocation5], 1
    %s1037 = scalar_lea.sflag [#allocation5], 1
    %1038 = vsyncpa %s1037, 1
    %1039 = vsyncpa [#allocation6], 1
    %s1040 = scalar_lea.sflag [#allocation6], 1
    %1041 = vsyncpa %s1040, 1

</llo_original>
